<compile_context>
chip_gen: v6e
topology: v6e:2x2x1
jax: 0.10.0
libtpu: 0.0.40
codegen_flags: <defaults>
</compile_context>

<pallas_src>
import functools

import jax
import jax.numpy as jnp
import numpy as np
from jax import lax
from jax.experimental import pallas as pl
from jax.experimental.pallas import tpu as pltpu


def _convt_relu_kernel(w_ref, x_ref, out_ref, *, lane_chunk, n_chunks):
    # w_ref:   (Cout, 3*Cin+1)   [w1^T, w0^T, w2^T, b]
    # x_ref:   (3*Cin+1, S)      rows = [A ; B ; C ; ones], columns already in (n, h_out, w) order
    # out_ref: (Cout, S)         final flattened NCHW layout (S = N*Hout*Wout, multiple of 128)
    w = w_ref[...]
    for c in range(n_chunks):                      # static unroll; bounds live vregs per chunk
        lo = c * lane_chunk
        p = jnp.dot(w, x_ref[:, lo:lo + lane_chunk],
                    preferred_element_type=jnp.float32)
        out_ref[:, lo:lo + lane_chunk] = jnp.maximum(p, 0.0).astype(out_ref.dtype)


def _pick_lane_chunk(S):
    for c in (640, 512, 384, 256, 128):
        if S % c == 0:
            return c
    return S


def pack_params(weight, bias):
    """ConvTranspose2d weight (Cin, Cout, 3, 1) + bias (Cout,) -> blocked W_aug (Cout, 3*Cin+1).

    Parameter-only: build once, reuse for every forward call.
    """
    w0 = weight[:, :, 0, 0].T.astype(jnp.float32)            # (Cout, Cin) height-kernel taps
    w1 = weight[:, :, 1, 0].T.astype(jnp.float32)
    w2 = weight[:, :, 2, 0].T.astype(jnp.float32)
    b = bias[:, None].astype(jnp.float32)                    # (Cout, 1)
    # column blocks line up with x_aug row blocks [A ; B ; C ; ones]
    return jnp.concatenate([w1, w0, w2, b], axis=1)          # (Cout, 3*Cin+1)


def conv_transpose_relu(x_nchw, w_aug):
    """x: (N, Cin, H, W) f32; w_aug: (Cout, 3*Cin+1). Returns (N, Cout, 2H, W-2)."""
    N, Cin, H, W = x_nchw.shape
    assert W >= 3
    Cout = w_aug.shape[0]
    Wout, Hout = W - 2, 2 * H
    S = N * Hout * Wout

    x = x_nchw.astype(jnp.float32)
    xc = x[:, :, :, 1:W - 1]                                          # (N, Cin, H, Wout) width crop
    z = jnp.zeros_like(xc)
    xs = jnp.concatenate([xc[:, :, 1:, :], z[:, :, :1, :]], axis=2)   # x[m+1] rows, zero past end

    # Interleave zeros on the (tiny, 3-channel) input so the kernel output is already in
    # final (h_out, w) order — no output-side transpose needed.
    A = jnp.stack([xc, z], axis=3).reshape(N, Cin, Hout, Wout)        # even rows: w1 tap sees x[m]
    B = jnp.stack([z, xs], axis=3).reshape(N, Cin, Hout, Wout)        # odd rows : w0 tap sees x[m+1]
    C = jnp.stack([z, xc], axis=3).reshape(N, Cin, Hout, Wout)        # odd rows : w2 tap sees x[m]
    blocks = jnp.concatenate([A, B, C], axis=1)                       # (N, 3*Cin, Hout, Wout)
    blocks = jnp.transpose(blocks, (1, 0, 2, 3)).reshape(3 * Cin, S)
    x_aug = jnp.concatenate([blocks, jnp.ones((1, S), jnp.float32)], axis=0)   # (3*Cin+1, S)

    lane_chunk = _pick_lane_chunk(S)
    kernel = functools.partial(_convt_relu_kernel,
                               lane_chunk=lane_chunk, n_chunks=S // lane_chunk)
    K = 3 * Cin + 1
    out = pl.pallas_call(
        kernel,
        out_shape=jax.ShapeDtypeStruct((Cout, S), jnp.float32),
        in_specs=[pl.BlockSpec(memory_space=pltpu.MemorySpace.VMEM)] * 2,
        out_specs=pl.BlockSpec(memory_space=pltpu.MemorySpace.VMEM),
        cost_estimate=pl.CostEstimate(
            flops=2 * Cout * K * S,
            transcendentals=0,
            bytes_accessed=4 * (Cout * K + K * S + Cout * S)),
    )(w_aug, x_aug)

    # Final layout: pure reshape (the transpose is a no-op for N == 1).
    y = out.reshape(Cout, N, Hout, Wout)
    return jnp.transpose(y, (1, 0, 2, 3))                             # (N, Cout, Hout, Wout)


if __name__ == "__main__":
    key = jax.random.PRNGKey(0)
    k1, k2, k3 = jax.random.split(key, 3)

    Cin, Cout, kH, kW = 3, 32, 3, 1
    N, H, W = 1, 32, 32                                   # matches the module's example input

    x = jax.random.normal(k1, (N, Cin, H, W), jnp.float32)
    bound = 1.0 / np.sqrt(Cin * kH * kW)
    weight = jax.random.uniform(k2, (Cin, Cout, kH, kW), jnp.float32, -bound, bound)
    bias = jax.random.uniform(k3, (Cout,), jnp.float32, -bound, bound)

    w_aug = jax.block_until_ready(pack_params(weight, bias))   # parameter packing: built once
    fwd = jax.jit(conv_transpose_relu)                         # packing + kernel + reshape fused
    y = jax.block_until_ready(fwd(x, w_aug))

    # Reference: ConvTranspose2d == conv with lhs_dilation=stride, spatially-flipped kernel,
    # padding (k-1-p, k-1-p+out_pad) per spatial dim, then ReLU.
    w_ref = jnp.transpose(jnp.flip(weight, axis=(2, 3)), (1, 0, 2, 3))   # (Cout, Cin, kH, kW)
    ref = lax.conv_general_dilated(
        x, w_ref,
        window_strides=(1, 1),
        padding=((1, 2), (-1, -1)),
        lhs_dilation=(2, 1),
        rhs_dilation=(1, 1),
        dimension_numbers=("NCHW", "OIHW", "NCHW"))
    ref = jnp.maximum(ref + bias[None, :, None, None], 0.0)

    np.testing.assert_allclose(np.asarray(y), np.asarray(ref), rtol=1e-5, atol=1e-5)
    print("KERNEL_OK")
</pallas_src>

<mosaic_0001>
module attributes {stable_mosaic.version = 11 : i64} {
  func.func @_convt_relu_kernel(%arg0: memref<32x10xf32, #tpu.memory_space<vmem>>, %arg1: memref<10x1920xf32, #tpu.memory_space<vmem>>, %arg2: memref<32x1920xf32, #tpu.memory_space<vmem>>) attributes {dimension_semantics = [], scalar_prefetch = 0 : i64, scratch_operands = 0 : i64, tpu.core_type = #tpu.core_type<tc>} {
    %c0 = arith.constant 0 : index
    %c0_0 = arith.constant 0 : index
    %0 = vector.load %arg0[%c0, %c0_0] : memref<32x10xf32, #tpu.memory_space<vmem>>, vector<32x10xf32>
    %c0_1 = arith.constant 0 : index
    %c0_2 = arith.constant 0 : index
    %1 = vector.load %arg1[%c0_1, %c0_2] : memref<10x1920xf32, #tpu.memory_space<vmem>>, vector<10x640xf32>
    %cst = arith.constant dense<0.000000e+00> : vector<32x640xf32>
    %2 = tpu.matmul %0, %1, %cst {dimension_numbers = #tpu.dot_dimension_numbers<[1], [0], [0], [1], [0, 0, 1, 1], [], []>} : vector<32x10xf32>, vector<10x640xf32>, vector<32x640xf32> -> vector<32x640xf32>
    %cst_3 = arith.constant 0.000000e+00 : f32
    %3 = vector.broadcast %cst_3 : f32 to vector<32x640xf32>
    %4 = arith.maximumf %2, %3 : vector<32x640xf32>
    %c0_4 = arith.constant 0 : index
    %c0_5 = arith.constant 0 : index
    %5 = vector.load %arg2[%c0_4, %c0_5] : memref<32x1920xf32, #tpu.memory_space<vmem>>, vector<32x640xf32>
    tpu.vector_store %arg2[%c0_4, %c0_5], %4 {strides = array<i32>} : memref<32x1920xf32, #tpu.memory_space<vmem>>, vector<32x640xf32>,
    %c0_6 = arith.constant 0 : index
    %c640 = arith.constant 640 : index
    %6 = vector.load %arg1[%c0_6, %c640] : memref<10x1920xf32, #tpu.memory_space<vmem>>, vector<10x640xf32>
    %cst_7 = arith.constant dense<0.000000e+00> : vector<32x640xf32>
    %7 = tpu.matmul %0, %6, %cst_7 {dimension_numbers = #tpu.dot_dimension_numbers<[1], [0], [0], [1], [0, 0, 1, 1], [], []>} : vector<32x10xf32>, vector<10x640xf32>, vector<32x640xf32> -> vector<32x640xf32>
    %cst_8 = arith.constant 0.000000e+00 : f32
    %8 = vector.broadcast %cst_8 : f32 to vector<32x640xf32>
    %9 = arith.maximumf %7, %8 : vector<32x640xf32>
    %c0_9 = arith.constant 0 : index
    %c640_10 = arith.constant 640 : index
    %10 = vector.load %arg2[%c0_9, %c640_10] : memref<32x1920xf32, #tpu.memory_space<vmem>>, vector<32x640xf32>
    tpu.vector_store %arg2[%c0_9, %c640_10], %9 {strides = array<i32>} : memref<32x1920xf32, #tpu.memory_space<vmem>>, vector<32x640xf32>,
    %c0_11 = arith.constant 0 : index
    %c1280 = arith.constant 1280 : index
    %11 = vector.load %arg1[%c0_11, %c1280] : memref<10x1920xf32, #tpu.memory_space<vmem>>, vector<10x640xf32>
    %cst_12 = arith.constant dense<0.000000e+00> : vector<32x640xf32>
    %12 = tpu.matmul %0, %11, %cst_12 {dimension_numbers = #tpu.dot_dimension_numbers<[1], [0], [0], [1], [0, 0, 1, 1], [], []>} : vector<32x10xf32>, vector<10x640xf32>, vector<32x640xf32> -> vector<32x640xf32>
    %cst_13 = arith.constant 0.000000e+00 : f32
    %13 = vector.broadcast %cst_13 : f32 to vector<32x640xf32>
    %14 = arith.maximumf %12, %13 : vector<32x640xf32>
    %c0_14 = arith.constant 0 : index
    %c1280_15 = arith.constant 1280 : index
    %15 = vector.load %arg2[%c0_14, %c1280_15] : memref<32x1920xf32, #tpu.memory_space<vmem>>, vector<32x640xf32>
    tpu.vector_store %arg2[%c0_14, %c1280_15], %14 {strides = array<i32>} : memref<32x1920xf32, #tpu.memory_space<vmem>>, vector<32x640xf32>,
    return
  }
}

</mosaic_0001>

<llo_original>
// kernel: conv_transpose_relu.1
$region0: #{conv_transpose_relu.1}
  #allocation0 [shape = 'u32[]', space=smem, size = 0x4, offset = 0x4, fixed_abs, tag = 'smem constant byte address 0x4 - core index']
  #allocation1 [shape = 'u32[144,128]{1,0:T(1,128)}', space=vmem, size = 0x12000, scoped, tag = 'internal scratch']
  %s0 = inlined_call_operand.vmem [shape: f32[32,10], index: 0, kind: input, shape index: {}]
  %s1 = inlined_call_operand.vmem [shape: f32[10,1920], index: 1, kind: input, shape index: {}]
  %s2 = inlined_call_operand.vmem [shape: f32[32,1920], index: 2, kind: output, shape index: {}]
  %s3 = sld [smem:[#allocation0]]
  $region18: #{conv_transpose_relu.1} parent=0
    _
  %s5 = ssub.s32 1, %s3
  %s6 = scalar_select 0, %s5, %s3
  // Predicated region
  $region2: #{conv_transpose_relu.1} parent=0 // pred_check
    _
  $region3: #{conv_transpose_relu.1} parent=0 // pred_check_branch
    %8 = sbr.rel (0) target = $region5
  $region4: #{conv_transpose_relu.1} parent=0 // pred_region
    _
  $region5: #{conv_transpose_relu.1} parent=0 // pred_fallthru
    _
  // Predicated region
  $region6: #{conv_transpose_relu.1} parent=0 // pred_check
    _
  $region7: #{conv_transpose_relu.1} parent=0 // pred_check_branch
    %10 = sbr.rel (0) target = $region9
  $region8: #{conv_transpose_relu.1} parent=0 // pred_region
    _
  $region9: #{conv_transpose_relu.1} parent=0 // pred_fallthru
    _
  %v11 = vld [vmem:[%s0] sm:$0xff]
  %v12 = vld [vmem:[%s0 + $0x8] sm:$0xff]
  %v13 = vld [vmem:[%s0 + $0x10] sm:$0xff]
  %v14 = vld [vmem:[%s0 + $0x18] sm:$0xff]
  %v15 = vld [vmem:[%s1] sm:$0xff]
  %v16 = vld [vmem:[%s1 + $0x8] sm:$0xff]
  %v17 = vld [vmem:[%s1 + $0x10] sm:$0xff]
  %v18 = vld [vmem:[%s1 + $0x18] sm:$0xff]
  %v19 = vld [vmem:[%s1 + $0x20] sm:$0xff]
  %v20 = vld [vmem:[%s1 + $0x78] sm:$0x3]
  %v21 = vld [vmem:[%s1 + $0x80] sm:$0x3]
  %v22 = vld [vmem:[%s1 + $0x88] sm:$0x3]
  %v23 = vld [vmem:[%s1 + $0x90] sm:$0x3]
  %v24 = vld [vmem:[%s1 + $0x98] sm:$0x3]
  %vm25 = vcmask 80896
  %v27 = vsel %vm25, %v11, 0
  %v30 = vsel %vm25, %v12, 0
  %v33 = vsel %vm25, %v13, 0
  %v36 = vsel %vm25, %v14, 0
  %vm38 = vcmask 1041408
  %v40 = vsel %vm38, %v20, 0
  %v43 = vsel %vm38, %v21, 0
  %v46 = vsel %vm38, %v22, 0
  %v49 = vsel %vm38, %v23, 0
  %v52 = vsel %vm38, %v24, 0
  %54 = vmatprep.subr.mxu0 0.0
  %55 = vmatpush1.msra.mxu0 0.0
  %56 = vmatprep.subr.mxu0 0.0
  %57 = vmatpush1.msra.mxu0 0.0
  %58 = vmatprep.subr.mxu0 0.0
  %59 = vmatpush1.msra.mxu0 0.0
  %60 = vmatprep.subr.mxu0 0.0
  %61 = vmatpush1.msra.mxu0 0.0
  %62 = vmatprep.subr.mxu0 0.0
  %63 = vmatpush1.msra.mxu0 0.0
  %64 = vmatprep.subr.mxu0 0.0
  %65 = vmatpush1.msra.mxu0 0.0
  %66 = vmatprep.subr.mxu0 0.0
  %67 = vmatpush1.msra.mxu0 0.0
  %68 = vmatprep.subr.mxu0 0.0
  %69 = vmatpush1.msra.mxu0 0.0
  %70 = vmatprep.subr.mxu0 0.0
  %71 = vmatpush1.msra.mxu0 0.0
  %72 = vmatprep.subr.mxu0 0.0
  %73 = vmatpush1.msra.mxu0 0.0
  %74 = vmatprep.subr.mxu0 0.0
  %75 = vmatpush1.msra.mxu0 0.0
  %76 = vmatprep.subr.mxu0 0.0
  %77 = vmatpush1.msra.mxu0 0.0
  %78 = vmatprep.subr.mxu0 0.0
  %79 = vmatpush1.msra.mxu0 0.0
  %80 = vmatprep.subr.mxu0 0.0
  %81 = vmatpush1.msra.mxu0 0.0
  %82 = vmatprep.subr.mxu0 %v43
  %83 = vmatpush1.msra.mxu0 %v40
  %84 = vmatprep.subr.mxu0 %v16
  %85 = vmatpush1.msra.mxu0 %v15
  %86 = vmatprep.subr.mxu0 0.0
  %87 = vmatpush2.msra.mxu0 0.0
  %88 = vmatprep.subr.mxu0 0.0
  %89 = vmatpush2.msra.mxu0 0.0
  %90 = vmatprep.subr.mxu0 0.0
  %91 = vmatpush2.msra.mxu0 0.0
  %92 = vmatprep.subr.mxu0 0.0
  %93 = vmatpush2.msra.mxu0 0.0
  %94 = vmatprep.subr.mxu0 0.0
  %95 = vmatpush2.msra.mxu0 0.0
  %96 = vmatprep.subr.mxu0 0.0
  %97 = vmatpush2.msra.mxu0 0.0
  %98 = vmatprep.subr.mxu0 0.0
  %99 = vmatpush2.msra.mxu0 0.0
  %100 = vmatprep.subr.mxu0 0.0
  %101 = vmatpush2.msra.mxu0 0.0
  %102 = vmatprep.subr.mxu0 0.0
  %103 = vmatpush2.msra.mxu0 0.0
  %104 = vmatprep.subr.mxu0 0.0
  %105 = vmatpush2.msra.mxu0 0.0
  %106 = vmatprep.subr.mxu0 0.0
  %107 = vmatpush2.msra.mxu0 0.0
  %108 = vmatprep.subr.mxu0 0.0
  %109 = vmatpush2.msra.mxu0 0.0
  %110 = vmatprep.subr.mxu0 0.0
  %111 = vmatpush2.msra.mxu0 0.0
  %112 = vmatprep.subr.mxu0 0.0
  %113 = vmatpush2.msra.mxu0 0.0
  %114 = vmatprep.subr.mxu0 0.0
  %115 = vmatpush2.msra.mxu0 0.0
  %116 = vmatprep.subr.mxu0 0.0
  %117 = vmatpush2.msra.mxu0 0.0
  %118 = vmatprep.mubr.f32.mxu0 0.0
  %119 = vmatmul.mubr.f32.gmra.mxu0 %v27
  %v120 = vpop.f32.mrf.mxu0
  %v121 = vadd.f32 0.0, %v120
  %v122 = vpop.f32.mrf.mxu0
  %v123 = vadd.f32 0.0, %v122
  %124 = vmatprep.mubr.f32.mxu0 0.0
  %125 = vmatmul.mubr.f32.gmra.mxu0 %v30
  %v126 = vpop.f32.mrf.mxu0
  %v127 = vadd.f32 0.0, %v126
  %v128 = vpop.f32.mrf.mxu0
  %v129 = vadd.f32 0.0, %v128
  %130 = vmatprep.mubr.f32.mxu0 0.0
  %131 = vmatmul.mubr.f32.gmra.mxu0 %v33
  %v132 = vpop.f32.mrf.mxu0
  %v133 = vadd.f32 0.0, %v132
  %v134 = vpop.f32.mrf.mxu0
  %v135 = vadd.f32 0.0, %v134
  %136 = vmatprep.mubr.f32.mxu0 0.0
  %137 = vmatmul.mubr.f32.gmra.mxu0 %v36
  %v138 = vpop.f32.mrf.mxu0
  %v139 = vadd.f32 0.0, %v138
  %v140 = vpop.f32.mrf.mxu0
  %v141 = vadd.f32 0.0, %v140
  %142 = vdwg.mxu0
  %143 = vmatprep.subr.mxu0 0.0
  %144 = vmatpush1.msra.mxu0 0.0
  %145 = vmatprep.subr.mxu0 0.0
  %146 = vmatpush1.msra.mxu0 0.0
  %147 = vmatprep.subr.mxu0 0.0
  %148 = vmatpush1.msra.mxu0 0.0
  %149 = vmatprep.subr.mxu0 0.0
  %150 = vmatpush1.msra.mxu0 0.0
  %151 = vmatprep.subr.mxu0 0.0
  %152 = vmatpush1.msra.mxu0 0.0
  %153 = vmatprep.subr.mxu0 0.0
  %154 = vmatpush1.msra.mxu0 0.0
  %155 = vmatprep.subr.mxu0 0.0
  %156 = vmatpush1.msra.mxu0 0.0
  %157 = vmatprep.subr.mxu0 0.0
  %158 = vmatpush1.msra.mxu0 0.0
  %159 = vmatprep.subr.mxu0 0.0
  %160 = vmatpush1.msra.mxu0 0.0
  %161 = vmatprep.subr.mxu0 0.0
  %162 = vmatpush1.msra.mxu0 0.0
  %163 = vmatprep.subr.mxu0 0.0
  %164 = vmatpush1.msra.mxu0 0.0
  %165 = vmatprep.subr.mxu0 0.0
  %166 = vmatpush1.msra.mxu0 0.0
  %167 = vmatprep.subr.mxu0 0.0
  %168 = vmatpush1.msra.mxu0 0.0
  %169 = vmatprep.subr.mxu0 0.0
  %170 = vmatpush1.msra.mxu0 0.0
  %171 = vmatprep.subr.mxu0 %v49
  %172 = vmatpush1.msra.mxu0 %v46
  %173 = vmatprep.subr.mxu0 %v18
  %174 = vmatpush1.msra.mxu0 %v17
  %175 = vmatprep.subr.mxu0 0.0
  %176 = vmatpush2.msra.mxu0 0.0
  %177 = vmatprep.subr.mxu0 0.0
  %178 = vmatpush2.msra.mxu0 0.0
  %179 = vmatprep.subr.mxu0 0.0
  %180 = vmatpush2.msra.mxu0 0.0
  %181 = vmatprep.subr.mxu0 0.0
  %182 = vmatpush2.msra.mxu0 0.0
  %183 = vmatprep.subr.mxu0 0.0
  %184 = vmatpush2.msra.mxu0 0.0
  %185 = vmatprep.subr.mxu0 0.0
  %186 = vmatpush2.msra.mxu0 0.0
  %187 = vmatprep.subr.mxu0 0.0
  %188 = vmatpush2.msra.mxu0 0.0
  %189 = vmatprep.subr.mxu0 0.0
  %190 = vmatpush2.msra.mxu0 0.0
  %191 = vmatprep.subr.mxu0 0.0
  %192 = vmatpush2.msra.mxu0 0.0
  %193 = vmatprep.subr.mxu0 0.0
  %194 = vmatpush2.msra.mxu0 0.0
  %195 = vmatprep.subr.mxu0 0.0
  %196 = vmatpush2.msra.mxu0 0.0
  %197 = vmatprep.subr.mxu0 0.0
  %198 = vmatpush2.msra.mxu0 0.0
  %199 = vmatprep.subr.mxu0 0.0
  %200 = vmatpush2.msra.mxu0 0.0
  %201 = vmatprep.subr.mxu0 0.0
  %202 = vmatpush2.msra.mxu0 0.0
  %203 = vmatprep.subr.mxu0 0.0
  %204 = vmatpush2.msra.mxu0 0.0
  %205 = vmatprep.subr.mxu0 0.0
  %206 = vmatpush2.msra.mxu0 0.0
  %207 = vmatprep.mubr.f32.mxu0 0.0
  %208 = vmatmul.mubr.f32.gmra.mxu0 %v27
  %v209 = vpop.f32.mrf.mxu0
  %v210 = vadd.f32 0.0, %v209
  %v211 = vpop.f32.mrf.mxu0
  %v212 = vadd.f32 0.0, %v211
  %213 = vmatprep.mubr.f32.mxu0 0.0
  %214 = vmatmul.mubr.f32.gmra.mxu0 %v30
  %v215 = vpop.f32.mrf.mxu0
  %v216 = vadd.f32 0.0, %v215
  %v217 = vpop.f32.mrf.mxu0
  %v218 = vadd.f32 0.0, %v217
  %219 = vmatprep.mubr.f32.mxu0 0.0
  %220 = vmatmul.mubr.f32.gmra.mxu0 %v33
  %v221 = vpop.f32.mrf.mxu0
  %v222 = vadd.f32 0.0, %v221
  %v223 = vpop.f32.mrf.mxu0
  %v224 = vadd.f32 0.0, %v223
  %225 = vmatprep.mubr.f32.mxu0 0.0
  %226 = vmatmul.mubr.f32.gmra.mxu0 %v36
  %v227 = vpop.f32.mrf.mxu0
  %v228 = vadd.f32 0.0, %v227
  %v229 = vpop.f32.mrf.mxu0
  %v230 = vadd.f32 0.0, %v229
  %231 = vdwg.mxu0
  %232 = vmatprep.subr.mxu0 0.0
  %233 = vmatpush1.msra.mxu0 0.0
  %234 = vmatprep.subr.mxu0 0.0
  %235 = vmatpush1.msra.mxu0 0.0
  %236 = vmatprep.subr.mxu0 0.0
  %237 = vmatpush1.msra.mxu0 0.0
  %238 = vmatprep.subr.mxu0 0.0
  %239 = vmatpush1.msra.mxu0 0.0
  %240 = vmatprep.subr.mxu0 0.0
  %241 = vmatpush1.msra.mxu0 0.0
  %242 = vmatprep.subr.mxu0 0.0
  %243 = vmatpush1.msra.mxu0 0.0
  %244 = vmatprep.subr.mxu0 0.0
  %245 = vmatpush1.msra.mxu0 0.0
  %246 = vmatprep.subr.mxu0 0.0
  %247 = vmatpush1.msra.mxu0 0.0
  %248 = vmatprep.subr.mxu0 0.0
  %249 = vmatpush1.msra.mxu0 0.0
  %250 = vmatprep.subr.mxu0 0.0
  %251 = vmatpush1.msra.mxu0 0.0
  %252 = vmatprep.subr.mxu0 0.0
  %253 = vmatpush1.msra.mxu0 0.0
  %254 = vmatprep.subr.mxu0 0.0
  %255 = vmatpush1.msra.mxu0 0.0
  %256 = vmatprep.subr.mxu0 0.0
  %257 = vmatpush1.msra.mxu0 0.0
  %258 = vmatprep.subr.mxu0 0.0
  %259 = vmatpush1.msra.mxu0 0.0
  %260 = vmatprep.subr.mxu0 0.0
  %261 = vmatpush1.msra.mxu0 %v52
  %262 = vmatprep.subr.mxu0 0.0
  %263 = vmatpush1.msra.mxu0 %v19
  %264 = vmatprep.subr.mxu0 0.0
  %265 = vmatpush2.msra.mxu0 0.0
  %266 = vmatprep.subr.mxu0 0.0
  %267 = vmatpush2.msra.mxu0 0.0
  %268 = vmatprep.subr.mxu0 0.0
  %269 = vmatpush2.msra.mxu0 0.0
  %270 = vmatprep.subr.mxu0 0.0
  %271 = vmatpush2.msra.mxu0 0.0
  %272 = vmatprep.subr.mxu0 0.0
  %273 = vmatpush2.msra.mxu0 0.0
  %274 = vmatprep.subr.mxu0 0.0
  %275 = vmatpush2.msra.mxu0 0.0
  %276 = vmatprep.subr.mxu0 0.0
  %277 = vmatpush2.msra.mxu0 0.0
  %278 = vmatprep.subr.mxu0 0.0
  %279 = vmatpush2.msra.mxu0 0.0
  %280 = vmatprep.subr.mxu0 0.0
  %281 = vmatpush2.msra.mxu0 0.0
  %282 = vmatprep.subr.mxu0 0.0
  %283 = vmatpush2.msra.mxu0 0.0
  %284 = vmatprep.subr.mxu0 0.0
  %285 = vmatpush2.msra.mxu0 0.0
  %286 = vmatprep.subr.mxu0 0.0
  %287 = vmatpush2.msra.mxu0 0.0
  %288 = vmatprep.subr.mxu0 0.0
  %289 = vmatpush2.msra.mxu0 0.0
  %290 = vmatprep.subr.mxu0 0.0
  %291 = vmatpush2.msra.mxu0 0.0
  %292 = vmatprep.subr.mxu0 0.0
  %293 = vmatpush2.msra.mxu0 0.0
  %294 = vmatprep.subr.mxu0 0.0
  %295 = vmatpush2.msra.mxu0 0.0
  %296 = vmatprep.mubr.f32.mxu0 0.0
  %297 = vmatmul.mubr.f32.gmra.mxu0 %v27
  %v298 = vpop.f32.mrf.mxu0
  %v299 = vadd.f32 0.0, %v298
  %v300 = vpop.f32.mrf.mxu0
  %301 = vmatprep.mubr.f32.mxu0 0.0
  %302 = vmatmul.mubr.f32.gmra.mxu0 %v30
  %v303 = vpop.f32.mrf.mxu0
  %v304 = vadd.f32 0.0, %v303
  %v305 = vpop.f32.mrf.mxu0
  %306 = vmatprep.mubr.f32.mxu0 0.0
  %307 = vmatmul.mubr.f32.gmra.mxu0 %v33
  %v308 = vpop.f32.mrf.mxu0
  %v309 = vadd.f32 0.0, %v308
  %v310 = vpop.f32.mrf.mxu0
  %311 = vmatprep.mubr.f32.mxu0 0.0
  %312 = vmatmul.mubr.f32.gmra.mxu0 %v36
  %v313 = vpop.f32.mrf.mxu0
  %v314 = vadd.f32 0.0, %v313
  %v315 = vpop.f32.mrf.mxu0
  %316 = vdwg.mxu0
  %v317 = vmax.f32 %v121, 0.0
  %v318 = vmax.f32 %v123, 0.0
  %v319 = vmax.f32 %v210, 0.0
  %v320 = vmax.f32 %v212, 0.0
  %v321 = vmax.f32 %v299, 0.0
  %v322 = vmax.f32 %v127, 0.0
  %v323 = vmax.f32 %v129, 0.0
  %v324 = vmax.f32 %v216, 0.0
  %v325 = vmax.f32 %v218, 0.0
  %v326 = vmax.f32 %v304, 0.0
  %v327 = vmax.f32 %v133, 0.0
  %v328 = vmax.f32 %v135, 0.0
  %v329 = vmax.f32 %v222, 0.0
  %v330 = vmax.f32 %v224, 0.0
  %v331 = vmax.f32 %v309, 0.0
  %v332 = vmax.f32 %v139, 0.0
  %v333 = vmax.f32 %v141, 0.0
  %v334 = vmax.f32 %v228, 0.0
  %v335 = vmax.f32 %v230, 0.0
  %v336 = vmax.f32 %v314, 0.0
  %337 = vst [vmem:[%s2] sm:$0xff] %v317
  %338 = vst [vmem:[%s2 + $0x8] sm:$0xff] %v318
  %339 = vst [vmem:[%s2 + $0x10] sm:$0xff] %v319
  %340 = vst [vmem:[%s2 + $0x18] sm:$0xff] %v320
  %341 = vst [vmem:[%s2 + $0x20] sm:$0xff] %v321
  %342 = vst [vmem:[%s2 + $0x78] sm:$0xff] %v322
  %343 = vst [vmem:[%s2 + $0x80] sm:$0xff] %v323
  %344 = vst [vmem:[%s2 + $0x88] sm:$0xff] %v324
  %345 = vst [vmem:[%s2 + $0x90] sm:$0xff] %v325
  %346 = vst [vmem:[%s2 + $0x98] sm:$0xff] %v326
  %347 = vst [vmem:[%s2 + $0xf0] sm:$0xff] %v327
  %348 = vst [vmem:[%s2 + $0xf8] sm:$0xff] %v328
  %349 = vst [vmem:[%s2 + $0x100] sm:$0xff] %v329
  %350 = vst [vmem:[%s2 + $0x108] sm:$0xff] %v330
  %351 = vst [vmem:[%s2 + $0x110] sm:$0xff] %v331
  %352 = vst [vmem:[%s2 + $0x168] sm:$0xff] %v332
  %353 = vst [vmem:[%s2 + $0x170] sm:$0xff] %v333
  %354 = vst [vmem:[%s2 + $0x178] sm:$0xff] %v334
  %355 = vst [vmem:[%s2 + $0x180] sm:$0xff] %v335
  %356 = vst [vmem:[%s2 + $0x188] sm:$0xff] %v336
  %v357 = vld [vmem:[%s1 + $0x28] sm:$0xff]
  %v358 = vld [vmem:[%s1 + $0x30] sm:$0xff]
  %v359 = vld [vmem:[%s1 + $0x38] sm:$0xff]
  %v360 = vld [vmem:[%s1 + $0x40] sm:$0xff]
  %v361 = vld [vmem:[%s1 + $0x48] sm:$0xff]
  %v362 = vld [vmem:[%s1 + $0xa0] sm:$0x3]
  %v363 = vld [vmem:[%s1 + $0xa8] sm:$0x3]
  %v364 = vld [vmem:[%s1 + $0xb0] sm:$0x3]
  %v365 = vld [vmem:[%s1 + $0xb8] sm:$0x3]
  %v366 = vld [vmem:[%s1 + $0xc0] sm:$0x3]
  %v368 = vsel %vm38, %v362, 0
  %v371 = vsel %vm38, %v363, 0
  %v374 = vsel %vm38, %v364, 0
  %v377 = vsel %vm38, %v365, 0
  %v380 = vsel %vm38, %v366, 0
  %382 = vmatprep.subr.mxu0 0.0
  %383 = vmatpush1.msra.mxu0 0.0
  %384 = vmatprep.subr.mxu0 0.0
  %385 = vmatpush1.msra.mxu0 0.0
  %386 = vmatprep.subr.mxu0 0.0
  %387 = vmatpush1.msra.mxu0 0.0
  %388 = vmatprep.subr.mxu0 0.0
  %389 = vmatpush1.msra.mxu0 0.0
  %390 = vmatprep.subr.mxu0 0.0
  %391 = vmatpush1.msra.mxu0 0.0
  %392 = vmatprep.subr.mxu0 0.0
  %393 = vmatpush1.msra.mxu0 0.0
  %394 = vmatprep.subr.mxu0 0.0
  %395 = vmatpush1.msra.mxu0 0.0
  %396 = vmatprep.subr.mxu0 0.0
  %397 = vmatpush1.msra.mxu0 0.0
  %398 = vmatprep.subr.mxu0 0.0
  %399 = vmatpush1.msra.mxu0 0.0
  %400 = vmatprep.subr.mxu0 0.0
  %401 = vmatpush1.msra.mxu0 0.0
  %402 = vmatprep.subr.mxu0 0.0
  %403 = vmatpush1.msra.mxu0 0.0
  %404 = vmatprep.subr.mxu0 0.0
  %405 = vmatpush1.msra.mxu0 0.0
  %406 = vmatprep.subr.mxu0 0.0
  %407 = vmatpush1.msra.mxu0 0.0
  %408 = vmatprep.subr.mxu0 0.0
  %409 = vmatpush1.msra.mxu0 0.0
  %410 = vmatprep.subr.mxu0 %v371
  %411 = vmatpush1.msra.mxu0 %v368
  %412 = vmatprep.subr.mxu0 %v358
  %413 = vmatpush1.msra.mxu0 %v357
  %414 = vmatprep.subr.mxu0 0.0
  %415 = vmatpush2.msra.mxu0 0.0
  %416 = vmatprep.subr.mxu0 0.0
  %417 = vmatpush2.msra.mxu0 0.0
  %418 = vmatprep.subr.mxu0 0.0
  %419 = vmatpush2.msra.mxu0 0.0
  %420 = vmatprep.subr.mxu0 0.0
  %421 = vmatpush2.msra.mxu0 0.0
  %422 = vmatprep.subr.mxu0 0.0
  %423 = vmatpush2.msra.mxu0 0.0
  %424 = vmatprep.subr.mxu0 0.0
  %425 = vmatpush2.msra.mxu0 0.0
  %426 = vmatprep.subr.mxu0 0.0
  %427 = vmatpush2.msra.mxu0 0.0
  %428 = vmatprep.subr.mxu0 0.0
  %429 = vmatpush2.msra.mxu0 0.0
  %430 = vmatprep.subr.mxu0 0.0
  %431 = vmatpush2.msra.mxu0 0.0
  %432 = vmatprep.subr.mxu0 0.0
  %433 = vmatpush2.msra.mxu0 0.0
  %434 = vmatprep.subr.mxu0 0.0
  %435 = vmatpush2.msra.mxu0 0.0
  %436 = vmatprep.subr.mxu0 0.0
  %437 = vmatpush2.msra.mxu0 0.0
  %438 = vmatprep.subr.mxu0 0.0
  %439 = vmatpush2.msra.mxu0 0.0
  %440 = vmatprep.subr.mxu0 0.0
  %441 = vmatpush2.msra.mxu0 0.0
  %442 = vmatprep.subr.mxu0 0.0
  %443 = vmatpush2.msra.mxu0 0.0
  %444 = vmatprep.subr.mxu0 0.0
  %445 = vmatpush2.msra.mxu0 0.0
  %446 = vmatprep.mubr.f32.mxu0 0.0
  %447 = vmatmul.mubr.f32.gmra.mxu0 %v27
  %v448 = vpop.f32.mrf.mxu0
  %v449 = vadd.f32 0.0, %v448
  %v450 = vpop.f32.mrf.mxu0
  %v451 = vadd.f32 0.0, %v450
  %452 = vmatprep.mubr.f32.mxu0 0.0
  %453 = vmatmul.mubr.f32.gmra.mxu0 %v30
  %v454 = vpop.f32.mrf.mxu0
  %v455 = vadd.f32 0.0, %v454
  %v456 = vpop.f32.mrf.mxu0
  %v457 = vadd.f32 0.0, %v456
  %458 = vmatprep.mubr.f32.mxu0 0.0
  %459 = vmatmul.mubr.f32.gmra.mxu0 %v33
  %v460 = vpop.f32.mrf.mxu0
  %v461 = vadd.f32 0.0, %v460
  %v462 = vpop.f32.mrf.mxu0
  %v463 = vadd.f32 0.0, %v462
  %464 = vmatprep.mubr.f32.mxu0 0.0
  %465 = vmatmul.mubr.f32.gmra.mxu0 %v36
  %v466 = vpop.f32.mrf.mxu0
  %v467 = vadd.f32 0.0, %v466
  %v468 = vpop.f32.mrf.mxu0
  %v469 = vadd.f32 0.0, %v468
  %470 = vdwg.mxu0
  %471 = vmatprep.subr.mxu0 0.0
  %472 = vmatpush1.msra.mxu0 0.0
  %473 = vmatprep.subr.mxu0 0.0
  %474 = vmatpush1.msra.mxu0 0.0
  %475 = vmatprep.subr.mxu0 0.0
  %476 = vmatpush1.msra.mxu0 0.0
  %477 = vmatprep.subr.mxu0 0.0
  %478 = vmatpush1.msra.mxu0 0.0
  %479 = vmatprep.subr.mxu0 0.0
  %480 = vmatpush1.msra.mxu0 0.0
  %481 = vmatprep.subr.mxu0 0.0
  %482 = vmatpush1.msra.mxu0 0.0
  %483 = vmatprep.subr.mxu0 0.0
  %484 = vmatpush1.msra.mxu0 0.0
  %485 = vmatprep.subr.mxu0 0.0
  %486 = vmatpush1.msra.mxu0 0.0
  %487 = vmatprep.subr.mxu0 0.0
  %488 = vmatpush1.msra.mxu0 0.0
  %489 = vmatprep.subr.mxu0 0.0
  %490 = vmatpush1.msra.mxu0 0.0
  %491 = vmatprep.subr.mxu0 0.0
  %492 = vmatpush1.msra.mxu0 0.0
  %493 = vmatprep.subr.mxu0 0.0
  %494 = vmatpush1.msra.mxu0 0.0
  %495 = vmatprep.subr.mxu0 0.0
  %496 = vmatpush1.msra.mxu0 0.0
  %497 = vmatprep.subr.mxu0 0.0
  %498 = vmatpush1.msra.mxu0 0.0
  %499 = vmatprep.subr.mxu0 %v377
  %500 = vmatpush1.msra.mxu0 %v374
  %501 = vmatprep.subr.mxu0 %v360
  %502 = vmatpush1.msra.mxu0 %v359
  %503 = vmatprep.subr.mxu0 0.0
  %504 = vmatpush2.msra.mxu0 0.0
  %505 = vmatprep.subr.mxu0 0.0
  %506 = vmatpush2.msra.mxu0 0.0
  %507 = vmatprep.subr.mxu0 0.0
  %508 = vmatpush2.msra.mxu0 0.0
  %509 = vmatprep.subr.mxu0 0.0
  %510 = vmatpush2.msra.mxu0 0.0
  %511 = vmatprep.subr.mxu0 0.0
  %512 = vmatpush2.msra.mxu0 0.0
  %513 = vmatprep.subr.mxu0 0.0
  %514 = vmatpush2.msra.mxu0 0.0
  %515 = vmatprep.subr.mxu0 0.0
  %516 = vmatpush2.msra.mxu0 0.0
  %517 = vmatprep.subr.mxu0 0.0
  %518 = vmatpush2.msra.mxu0 0.0
  %519 = vmatprep.subr.mxu0 0.0
  %520 = vmatpush2.msra.mxu0 0.0
  %521 = vmatprep.subr.mxu0 0.0
  %522 = vmatpush2.msra.mxu0 0.0
  %523 = vmatprep.subr.mxu0 0.0
  %524 = vmatpush2.msra.mxu0 0.0
  %525 = vmatprep.subr.mxu0 0.0
  %526 = vmatpush2.msra.mxu0 0.0
  %527 = vmatprep.subr.mxu0 0.0
  %528 = vmatpush2.msra.mxu0 0.0
  %529 = vmatprep.subr.mxu0 0.0
  %530 = vmatpush2.msra.mxu0 0.0
  %531 = vmatprep.subr.mxu0 0.0
  %532 = vmatpush2.msra.mxu0 0.0
  %533 = vmatprep.subr.mxu0 0.0
  %534 = vmatpush2.msra.mxu0 0.0
  %535 = vmatprep.mubr.f32.mxu0 0.0
  %536 = vmatmul.mubr.f32.gmra.mxu0 %v27
  %v537 = vpop.f32.mrf.mxu0
  %v538 = vadd.f32 0.0, %v537
  %v539 = vpop.f32.mrf.mxu0
  %v540 = vadd.f32 0.0, %v539
  %541 = vmatprep.mubr.f32.mxu0 0.0
  %542 = vmatmul.mubr.f32.gmra.mxu0 %v30
  %v543 = vpop.f32.mrf.mxu0
  %v544 = vadd.f32 0.0, %v543
  %v545 = vpop.f32.mrf.mxu0
  %v546 = vadd.f32 0.0, %v545
  %547 = vmatprep.mubr.f32.mxu0 0.0
  %548 = vmatmul.mubr.f32.gmra.mxu0 %v33
  %v549 = vpop.f32.mrf.mxu0
  %v550 = vadd.f32 0.0, %v549
  %v551 = vpop.f32.mrf.mxu0
  %v552 = vadd.f32 0.0, %v551
  %553 = vmatprep.mubr.f32.mxu0 0.0
  %554 = vmatmul.mubr.f32.gmra.mxu0 %v36
  %v555 = vpop.f32.mrf.mxu0
  %v556 = vadd.f32 0.0, %v555
  %v557 = vpop.f32.mrf.mxu0
  %v558 = vadd.f32 0.0, %v557
  %559 = vdwg.mxu0
  %560 = vmatprep.subr.mxu0 0.0
  %561 = vmatpush1.msra.mxu0 0.0
  %562 = vmatprep.subr.mxu0 0.0
  %563 = vmatpush1.msra.mxu0 0.0
  %564 = vmatprep.subr.mxu0 0.0
  %565 = vmatpush1.msra.mxu0 0.0
  %566 = vmatprep.subr.mxu0 0.0
  %567 = vmatpush1.msra.mxu0 0.0
  %568 = vmatprep.subr.mxu0 0.0
  %569 = vmatpush1.msra.mxu0 0.0
  %570 = vmatprep.subr.mxu0 0.0
  %571 = vmatpush1.msra.mxu0 0.0
  %572 = vmatprep.subr.mxu0 0.0
  %573 = vmatpush1.msra.mxu0 0.0
  %574 = vmatprep.subr.mxu0 0.0
  %575 = vmatpush1.msra.mxu0 0.0
  %576 = vmatprep.subr.mxu0 0.0
  %577 = vmatpush1.msra.mxu0 0.0
  %578 = vmatprep.subr.mxu0 0.0
  %579 = vmatpush1.msra.mxu0 0.0
  %580 = vmatprep.subr.mxu0 0.0
  %581 = vmatpush1.msra.mxu0 0.0
  %582 = vmatprep.subr.mxu0 0.0
  %583 = vmatpush1.msra.mxu0 0.0
  %584 = vmatprep.subr.mxu0 0.0
  %585 = vmatpush1.msra.mxu0 0.0
  %586 = vmatprep.subr.mxu0 0.0
  %587 = vmatpush1.msra.mxu0 0.0
  %588 = vmatprep.subr.mxu0 0.0
  %589 = vmatpush1.msra.mxu0 %v380
  %590 = vmatprep.subr.mxu0 0.0
  %591 = vmatpush1.msra.mxu0 %v361
  %592 = vmatprep.subr.mxu0 0.0
  %593 = vmatpush2.msra.mxu0 0.0
  %594 = vmatprep.subr.mxu0 0.0
  %595 = vmatpush2.msra.mxu0 0.0
  %596 = vmatprep.subr.mxu0 0.0
  %597 = vmatpush2.msra.mxu0 0.0
  %598 = vmatprep.subr.mxu0 0.0
  %599 = vmatpush2.msra.mxu0 0.0
  %600 = vmatprep.subr.mxu0 0.0
  %601 = vmatpush2.msra.mxu0 0.0
  %602 = vmatprep.subr.mxu0 0.0
  %603 = vmatpush2.msra.mxu0 0.0
  %604 = vmatprep.subr.mxu0 0.0
  %605 = vmatpush2.msra.mxu0 0.0
  %606 = vmatprep.subr.mxu0 0.0
  %607 = vmatpush2.msra.mxu0 0.0
  %608 = vmatprep.subr.mxu0 0.0
  %609 = vmatpush2.msra.mxu0 0.0
  %610 = vmatprep.subr.mxu0 0.0
  %611 = vmatpush2.msra.mxu0 0.0
  %612 = vmatprep.subr.mxu0 0.0
  %613 = vmatpush2.msra.mxu0 0.0
  %614 = vmatprep.subr.mxu0 0.0
  %615 = vmatpush2.msra.mxu0 0.0
  %616 = vmatprep.subr.mxu0 0.0
  %617 = vmatpush2.msra.mxu0 0.0
  %618 = vmatprep.subr.mxu0 0.0
  %619 = vmatpush2.msra.mxu0 0.0
  %620 = vmatprep.subr.mxu0 0.0
  %621 = vmatpush2.msra.mxu0 0.0
  %622 = vmatprep.subr.mxu0 0.0
  %623 = vmatpush2.msra.mxu0 0.0
  %624 = vmatprep.mubr.f32.mxu0 0.0
  %625 = vmatmul.mubr.f32.gmra.mxu0 %v27
  %v626 = vpop.f32.mrf.mxu0
  %v627 = vadd.f32 0.0, %v626
  %v628 = vpop.f32.mrf.mxu0
  %629 = vmatprep.mubr.f32.mxu0 0.0
  %630 = vmatmul.mubr.f32.gmra.mxu0 %v30
  %v631 = vpop.f32.mrf.mxu0
  %v632 = vadd.f32 0.0, %v631
  %v633 = vpop.f32.mrf.mxu0
  %634 = vmatprep.mubr.f32.mxu0 0.0
  %635 = vmatmul.mubr.f32.gmra.mxu0 %v33
  %v636 = vpop.f32.mrf.mxu0
  %v637 = vadd.f32 0.0, %v636
  %v638 = vpop.f32.mrf.mxu0
  %639 = vmatprep.mubr.f32.mxu0 0.0
  %640 = vmatmul.mubr.f32.gmra.mxu0 %v36
  %v641 = vpop.f32.mrf.mxu0
  %v642 = vadd.f32 0.0, %v641
  %v643 = vpop.f32.mrf.mxu0
  %644 = vdwg.mxu0
  %v645 = vmax.f32 %v449, 0.0
  %v646 = vmax.f32 %v451, 0.0
  %v647 = vmax.f32 %v538, 0.0
  %v648 = vmax.f32 %v540, 0.0
  %v649 = vmax.f32 %v627, 0.0
  %v650 = vmax.f32 %v455, 0.0
  %v651 = vmax.f32 %v457, 0.0
  %v652 = vmax.f32 %v544, 0.0
  %v653 = vmax.f32 %v546, 0.0
  %v654 = vmax.f32 %v632, 0.0
  %v655 = vmax.f32 %v461, 0.0
  %v656 = vmax.f32 %v463, 0.0
  %v657 = vmax.f32 %v550, 0.0
  %v658 = vmax.f32 %v552, 0.0
  %v659 = vmax.f32 %v637, 0.0
  %v660 = vmax.f32 %v467, 0.0
  %v661 = vmax.f32 %v469, 0.0
  %v662 = vmax.f32 %v556, 0.0
  %v663 = vmax.f32 %v558, 0.0
  %v664 = vmax.f32 %v642, 0.0
  %665 = vst [vmem:[%s2 + $0x28] sm:$0xff] %v645
  %666 = vst [vmem:[%s2 + $0x30] sm:$0xff] %v646
  %667 = vst [vmem:[%s2 + $0x38] sm:$0xff] %v647
  %668 = vst [vmem:[%s2 + $0x40] sm:$0xff] %v648
  %669 = vst [vmem:[%s2 + $0x48] sm:$0xff] %v649
  %670 = vst [vmem:[%s2 + $0xa0] sm:$0xff] %v650
  %671 = vst [vmem:[%s2 + $0xa8] sm:$0xff] %v651
  %672 = vst [vmem:[%s2 + $0xb0] sm:$0xff] %v652
  %673 = vst [vmem:[%s2 + $0xb8] sm:$0xff] %v653
  %674 = vst [vmem:[%s2 + $0xc0] sm:$0xff] %v654
  %675 = vst [vmem:[%s2 + $0x118] sm:$0xff] %v655
  %676 = vst [vmem:[%s2 + $0x120] sm:$0xff] %v656
  %677 = vst [vmem:[%s2 + $0x128] sm:$0xff] %v657
  %678 = vst [vmem:[%s2 + $0x130] sm:$0xff] %v658
  %679 = vst [vmem:[%s2 + $0x138] sm:$0xff] %v659
  %680 = vst [vmem:[%s2 + $0x190] sm:$0xff] %v660
  %681 = vst [vmem:[%s2 + $0x198] sm:$0xff] %v661
  %682 = vst [vmem:[%s2 + $0x1a0] sm:$0xff] %v662
  %683 = vst [vmem:[%s2 + $0x1a8] sm:$0xff] %v663
  %684 = vst [vmem:[%s2 + $0x1b0] sm:$0xff] %v664
  %v685 = vld [vmem:[%s1 + $0x50] sm:$0xff]
  %v686 = vld [vmem:[%s1 + $0x58] sm:$0xff]
  %v687 = vld [vmem:[%s1 + $0x60] sm:$0xff]
  %v688 = vld [vmem:[%s1 + $0x68] sm:$0xff]
  %v689 = vld [vmem:[%s1 + $0x70] sm:$0xff]
  %v690 = vld [vmem:[%s1 + $0xc8] sm:$0x3]
  %v691 = vld [vmem:[%s1 + $0xd0] sm:$0x3]
  %v692 = vld [vmem:[%s1 + $0xd8] sm:$0x3]
  %v693 = vld [vmem:[%s1 + $0xe0] sm:$0x3]
  %v694 = vld [vmem:[%s1 + $0xe8] sm:$0x3]
  %v696 = vsel %vm38, %v690, 0
  %v699 = vsel %vm38, %v691, 0
  %v702 = vsel %vm38, %v692, 0
  %v705 = vsel %vm38, %v693, 0
  %v708 = vsel %vm38, %v694, 0
  %710 = vmatprep.subr.mxu0 0.0
  %711 = vmatpush1.msra.mxu0 0.0
  %712 = vmatprep.subr.mxu0 0.0
  %713 = vmatpush1.msra.mxu0 0.0
  %714 = vmatprep.subr.mxu0 0.0
  %715 = vmatpush1.msra.mxu0 0.0
  %716 = vmatprep.subr.mxu0 0.0
  %717 = vmatpush1.msra.mxu0 0.0
  %718 = vmatprep.subr.mxu0 0.0
  %719 = vmatpush1.msra.mxu0 0.0
  %720 = vmatprep.subr.mxu0 0.0
  %721 = vmatpush1.msra.mxu0 0.0
  %722 = vmatprep.subr.mxu0 0.0
  %723 = vmatpush1.msra.mxu0 0.0
  %724 = vmatprep.subr.mxu0 0.0
  %725 = vmatpush1.msra.mxu0 0.0
  %726 = vmatprep.subr.mxu0 0.0
  %727 = vmatpush1.msra.mxu0 0.0
  %728 = vmatprep.subr.mxu0 0.0
  %729 = vmatpush1.msra.mxu0 0.0
  %730 = vmatprep.subr.mxu0 0.0
  %731 = vmatpush1.msra.mxu0 0.0
  %732 = vmatprep.subr.mxu0 0.0
  %733 = vmatpush1.msra.mxu0 0.0
  %734 = vmatprep.subr.mxu0 0.0
  %735 = vmatpush1.msra.mxu0 0.0
  %736 = vmatprep.subr.mxu0 0.0
  %737 = vmatpush1.msra.mxu0 0.0
  %738 = vmatprep.subr.mxu0 %v699
  %739 = vmatpush1.msra.mxu0 %v696
  %740 = vmatprep.subr.mxu0 %v686
  %741 = vmatpush1.msra.mxu0 %v685
  %742 = vmatprep.subr.mxu0 0.0
  %743 = vmatpush2.msra.mxu0 0.0
  %744 = vmatprep.subr.mxu0 0.0
  %745 = vmatpush2.msra.mxu0 0.0
  %746 = vmatprep.subr.mxu0 0.0
  %747 = vmatpush2.msra.mxu0 0.0
  %748 = vmatprep.subr.mxu0 0.0
  %749 = vmatpush2.msra.mxu0 0.0
  %750 = vmatprep.subr.mxu0 0.0
  %751 = vmatpush2.msra.mxu0 0.0
  %752 = vmatprep.subr.mxu0 0.0
  %753 = vmatpush2.msra.mxu0 0.0
  %754 = vmatprep.subr.mxu0 0.0
  %755 = vmatpush2.msra.mxu0 0.0
  %756 = vmatprep.subr.mxu0 0.0
  %757 = vmatpush2.msra.mxu0 0.0
  %758 = vmatprep.subr.mxu0 0.0
  %759 = vmatpush2.msra.mxu0 0.0
  %760 = vmatprep.subr.mxu0 0.0
  %761 = vmatpush2.msra.mxu0 0.0
  %762 = vmatprep.subr.mxu0 0.0
  %763 = vmatpush2.msra.mxu0 0.0
  %764 = vmatprep.subr.mxu0 0.0
  %765 = vmatpush2.msra.mxu0 0.0
  %766 = vmatprep.subr.mxu0 0.0
  %767 = vmatpush2.msra.mxu0 0.0
  %768 = vmatprep.subr.mxu0 0.0
  %769 = vmatpush2.msra.mxu0 0.0
  %770 = vmatprep.subr.mxu0 0.0
  %771 = vmatpush2.msra.mxu0 0.0
  %772 = vmatprep.subr.mxu0 0.0
  %773 = vmatpush2.msra.mxu0 0.0
  %774 = vmatprep.mubr.f32.mxu0 0.0
  %775 = vmatmul.mubr.f32.gmra.mxu0 %v27
  %v776 = vpop.f32.mrf.mxu0
  %v777 = vadd.f32 0.0, %v776
  %v778 = vpop.f32.mrf.mxu0
  %v779 = vadd.f32 0.0, %v778
  %780 = vmatprep.mubr.f32.mxu0 0.0
  %781 = vmatmul.mubr.f32.gmra.mxu0 %v30
  %v782 = vpop.f32.mrf.mxu0
  %v783 = vadd.f32 0.0, %v782
  %v784 = vpop.f32.mrf.mxu0
  %v785 = vadd.f32 0.0, %v784
  %786 = vmatprep.mubr.f32.mxu0 0.0
  %787 = vmatmul.mubr.f32.gmra.mxu0 %v33
  %v788 = vpop.f32.mrf.mxu0
  %v789 = vadd.f32 0.0, %v788
  %v790 = vpop.f32.mrf.mxu0
  %v791 = vadd.f32 0.0, %v790
  %792 = vmatprep.mubr.f32.mxu0 0.0
  %793 = vmatmul.mubr.f32.gmra.mxu0 %v36
  %v794 = vpop.f32.mrf.mxu0
  %v795 = vadd.f32 0.0, %v794
  %v796 = vpop.f32.mrf.mxu0
  %v797 = vadd.f32 0.0, %v796
  %798 = vdwg.mxu0
  %799 = vmatprep.subr.mxu0 0.0
  %800 = vmatpush1.msra.mxu0 0.0
  %801 = vmatprep.subr.mxu0 0.0
  %802 = vmatpush1.msra.mxu0 0.0
  %803 = vmatprep.subr.mxu0 0.0
  %804 = vmatpush1.msra.mxu0 0.0
  %805 = vmatprep.subr.mxu0 0.0
  %806 = vmatpush1.msra.mxu0 0.0
  %807 = vmatprep.subr.mxu0 0.0
  %808 = vmatpush1.msra.mxu0 0.0
  %809 = vmatprep.subr.mxu0 0.0
  %810 = vmatpush1.msra.mxu0 0.0
  %811 = vmatprep.subr.mxu0 0.0
  %812 = vmatpush1.msra.mxu0 0.0
  %813 = vmatprep.subr.mxu0 0.0
  %814 = vmatpush1.msra.mxu0 0.0
  %815 = vmatprep.subr.mxu0 0.0
  %816 = vmatpush1.msra.mxu0 0.0
  %817 = vmatprep.subr.mxu0 0.0
  %818 = vmatpush1.msra.mxu0 0.0
  %819 = vmatprep.subr.mxu0 0.0
  %820 = vmatpush1.msra.mxu0 0.0
  %821 = vmatprep.subr.mxu0 0.0
  %822 = vmatpush1.msra.mxu0 0.0
  %823 = vmatprep.subr.mxu0 0.0
  %824 = vmatpush1.msra.mxu0 0.0
  %825 = vmatprep.subr.mxu0 0.0
  %826 = vmatpush1.msra.mxu0 0.0
  %827 = vmatprep.subr.mxu0 %v705
  %828 = vmatpush1.msra.mxu0 %v702
  %829 = vmatprep.subr.mxu0 %v688
  %830 = vmatpush1.msra.mxu0 %v687
  %831 = vmatprep.subr.mxu0 0.0
  %832 = vmatpush2.msra.mxu0 0.0
  %833 = vmatprep.subr.mxu0 0.0
  %834 = vmatpush2.msra.mxu0 0.0
  %835 = vmatprep.subr.mxu0 0.0
  %836 = vmatpush2.msra.mxu0 0.0
  %837 = vmatprep.subr.mxu0 0.0
  %838 = vmatpush2.msra.mxu0 0.0
  %839 = vmatprep.subr.mxu0 0.0
  %840 = vmatpush2.msra.mxu0 0.0
  %841 = vmatprep.subr.mxu0 0.0
  %842 = vmatpush2.msra.mxu0 0.0
  %843 = vmatprep.subr.mxu0 0.0
  %844 = vmatpush2.msra.mxu0 0.0
  %845 = vmatprep.subr.mxu0 0.0
  %846 = vmatpush2.msra.mxu0 0.0
  %847 = vmatprep.subr.mxu0 0.0
  %848 = vmatpush2.msra.mxu0 0.0
  %849 = vmatprep.subr.mxu0 0.0
  %850 = vmatpush2.msra.mxu0 0.0
  %851 = vmatprep.subr.mxu0 0.0
  %852 = vmatpush2.msra.mxu0 0.0
  %853 = vmatprep.subr.mxu0 0.0
  %854 = vmatpush2.msra.mxu0 0.0
  %855 = vmatprep.subr.mxu0 0.0
  %856 = vmatpush2.msra.mxu0 0.0
  %857 = vmatprep.subr.mxu0 0.0
  %858 = vmatpush2.msra.mxu0 0.0
  %859 = vmatprep.subr.mxu0 0.0
  %860 = vmatpush2.msra.mxu0 0.0
  %861 = vmatprep.subr.mxu0 0.0
  %862 = vmatpush2.msra.mxu0 0.0
  %863 = vmatprep.mubr.f32.mxu0 0.0
  %864 = vmatmul.mubr.f32.gmra.mxu0 %v27
  %v865 = vpop.f32.mrf.mxu0
  %v866 = vadd.f32 0.0, %v865
  %v867 = vpop.f32.mrf.mxu0
  %v868 = vadd.f32 0.0, %v867
  %869 = vmatprep.mubr.f32.mxu0 0.0
  %870 = vmatmul.mubr.f32.gmra.mxu0 %v30
  %v871 = vpop.f32.mrf.mxu0
  %v872 = vadd.f32 0.0, %v871
  %v873 = vpop.f32.mrf.mxu0
  %v874 = vadd.f32 0.0, %v873
  %875 = vmatprep.mubr.f32.mxu0 0.0
  %876 = vmatmul.mubr.f32.gmra.mxu0 %v33
  %v877 = vpop.f32.mrf.mxu0
  %v878 = vadd.f32 0.0, %v877
  %v879 = vpop.f32.mrf.mxu0
  %v880 = vadd.f32 0.0, %v879
  %881 = vmatprep.mubr.f32.mxu0 0.0
  %882 = vmatmul.mubr.f32.gmra.mxu0 %v36
  %v883 = vpop.f32.mrf.mxu0
  %v884 = vadd.f32 0.0, %v883
  %v885 = vpop.f32.mrf.mxu0
  %v886 = vadd.f32 0.0, %v885
  %887 = vdwg.mxu0
  %888 = vmatprep.subr.mxu0 0.0
  %889 = vmatpush1.msra.mxu0 0.0
  %890 = vmatprep.subr.mxu0 0.0
  %891 = vmatpush1.msra.mxu0 0.0
  %892 = vmatprep.subr.mxu0 0.0
  %893 = vmatpush1.msra.mxu0 0.0
  %894 = vmatprep.subr.mxu0 0.0
  %895 = vmatpush1.msra.mxu0 0.0
  %896 = vmatprep.subr.mxu0 0.0
  %897 = vmatpush1.msra.mxu0 0.0
  %898 = vmatprep.subr.mxu0 0.0
  %899 = vmatpush1.msra.mxu0 0.0
  %900 = vmatprep.subr.mxu0 0.0
  %901 = vmatpush1.msra.mxu0 0.0
  %902 = vmatprep.subr.mxu0 0.0
  %903 = vmatpush1.msra.mxu0 0.0
  %904 = vmatprep.subr.mxu0 0.0
  %905 = vmatpush1.msra.mxu0 0.0
  %906 = vmatprep.subr.mxu0 0.0
  %907 = vmatpush1.msra.mxu0 0.0
  %908 = vmatprep.subr.mxu0 0.0
  %909 = vmatpush1.msra.mxu0 0.0
  %910 = vmatprep.subr.mxu0 0.0
  %911 = vmatpush1.msra.mxu0 0.0
  %912 = vmatprep.subr.mxu0 0.0
  %913 = vmatpush1.msra.mxu0 0.0
  %914 = vmatprep.subr.mxu0 0.0
  %915 = vmatpush1.msra.mxu0 0.0
  %916 = vmatprep.subr.mxu0 0.0
  %917 = vmatpush1.msra.mxu0 %v708
  %918 = vmatprep.subr.mxu0 0.0
  %919 = vmatpush1.msra.mxu0 %v689
  %920 = vmatprep.subr.mxu0 0.0
  %921 = vmatpush2.msra.mxu0 0.0
  %922 = vmatprep.subr.mxu0 0.0
  %923 = vmatpush2.msra.mxu0 0.0
  %924 = vmatprep.subr.mxu0 0.0
  %925 = vmatpush2.msra.mxu0 0.0
  %926 = vmatprep.subr.mxu0 0.0
  %927 = vmatpush2.msra.mxu0 0.0
  %928 = vmatprep.subr.mxu0 0.0
  %929 = vmatpush2.msra.mxu0 0.0
  %930 = vmatprep.subr.mxu0 0.0
  %931 = vmatpush2.msra.mxu0 0.0
  %932 = vmatprep.subr.mxu0 0.0
  %933 = vmatpush2.msra.mxu0 0.0
  %934 = vmatprep.subr.mxu0 0.0
  %935 = vmatpush2.msra.mxu0 0.0
  %936 = vmatprep.subr.mxu0 0.0
  %937 = vmatpush2.msra.mxu0 0.0
  %938 = vmatprep.subr.mxu0 0.0
  %939 = vmatpush2.msra.mxu0 0.0
  %940 = vmatprep.subr.mxu0 0.0
  %941 = vmatpush2.msra.mxu0 0.0
  %942 = vmatprep.subr.mxu0 0.0
  %943 = vmatpush2.msra.mxu0 0.0
  %944 = vmatprep.subr.mxu0 0.0
  %945 = vmatpush2.msra.mxu0 0.0
  %946 = vmatprep.subr.mxu0 0.0
  %947 = vmatpush2.msra.mxu0 0.0
  %948 = vmatprep.subr.mxu0 0.0
  %949 = vmatpush2.msra.mxu0 0.0
  %950 = vmatprep.subr.mxu0 0.0
  %951 = vmatpush2.msra.mxu0 0.0
  %952 = vmatprep.mubr.f32.mxu0 0.0
  %953 = vmatmul.mubr.f32.gmra.mxu0 %v27
  %v954 = vpop.f32.mrf.mxu0
  %v955 = vadd.f32 0.0, %v954
  %v956 = vpop.f32.mrf.mxu0
  %957 = vmatprep.mubr.f32.mxu0 0.0
  %958 = vmatmul.mubr.f32.gmra.mxu0 %v30
  %v959 = vpop.f32.mrf.mxu0
  %v960 = vadd.f32 0.0, %v959
  %v961 = vpop.f32.mrf.mxu0
  %962 = vmatprep.mubr.f32.mxu0 0.0
  %963 = vmatmul.mubr.f32.gmra.mxu0 %v33
  %v964 = vpop.f32.mrf.mxu0
  %v965 = vadd.f32 0.0, %v964
  %v966 = vpop.f32.mrf.mxu0
  %967 = vmatprep.mubr.f32.mxu0 0.0
  %968 = vmatmul.mubr.f32.gmra.mxu0 %v36
  %v969 = vpop.f32.mrf.mxu0
  %v970 = vadd.f32 0.0, %v969
  %v971 = vpop.f32.mrf.mxu0
  %972 = vdwg.mxu0
  %v973 = vmax.f32 %v777, 0.0
  %v974 = vmax.f32 %v779, 0.0
  %v975 = vmax.f32 %v866, 0.0
  %v976 = vmax.f32 %v868, 0.0
  %v977 = vmax.f32 %v955, 0.0
  %v978 = vmax.f32 %v783, 0.0
  %v979 = vmax.f32 %v785, 0.0
  %v980 = vmax.f32 %v872, 0.0
  %v981 = vmax.f32 %v874, 0.0
  %v982 = vmax.f32 %v960, 0.0
  %v983 = vmax.f32 %v789, 0.0
  %v984 = vmax.f32 %v791, 0.0
  %v985 = vmax.f32 %v878, 0.0
  %v986 = vmax.f32 %v880, 0.0
  %v987 = vmax.f32 %v965, 0.0
  %v988 = vmax.f32 %v795, 0.0
  %v989 = vmax.f32 %v797, 0.0
  %v990 = vmax.f32 %v884, 0.0
  %v991 = vmax.f32 %v886, 0.0
  %v992 = vmax.f32 %v970, 0.0
  %993 = vst [vmem:[%s2 + $0x50] sm:$0xff] %v973
  %994 = vst [vmem:[%s2 + $0x58] sm:$0xff] %v974
  %995 = vst [vmem:[%s2 + $0x60] sm:$0xff] %v975
  %996 = vst [vmem:[%s2 + $0x68] sm:$0xff] %v976
  %997 = vst [vmem:[%s2 + $0x70] sm:$0xff] %v977
  %998 = vst [vmem:[%s2 + $0xc8] sm:$0xff] %v978
  %999 = vst [vmem:[%s2 + $0xd0] sm:$0xff] %v979
  %1000 = vst [vmem:[%s2 + $0xd8] sm:$0xff] %v980
  %1001 = vst [vmem:[%s2 + $0xe0] sm:$0xff] %v981
  %1002 = vst [vmem:[%s2 + $0xe8] sm:$0xff] %v982
  %1003 = vst [vmem:[%s2 + $0x140] sm:$0xff] %v983
  %1004 = vst [vmem:[%s2 + $0x148] sm:$0xff] %v984
  %1005 = vst [vmem:[%s2 + $0x150] sm:$0xff] %v985
  %1006 = vst [vmem:[%s2 + $0x158] sm:$0xff] %v986
  %1007 = vst [vmem:[%s2 + $0x160] sm:$0xff] %v987
  %1008 = vst [vmem:[%s2 + $0x1b8] sm:$0xff] %v988
  %1009 = vst [vmem:[%s2 + $0x1c0] sm:$0xff] %v989
  %1010 = vst [vmem:[%s2 + $0x1c8] sm:$0xff] %v990
  %1011 = vst [vmem:[%s2 + $0x1d0] sm:$0xff] %v991
  %1012 = vst [vmem:[%s2 + $0x1d8] sm:$0xff] %v992
  // Predicated region
  $region10: #{conv_transpose_relu.1} parent=0 // pred_check
    _
  $region11: #{conv_transpose_relu.1} parent=0 // pred_check_branch
    %1014 = sbr.rel (0) target = $region13
  $region12: #{conv_transpose_relu.1} parent=0 // pred_region
    _
  $region13: #{conv_transpose_relu.1} parent=0 // pred_fallthru
    _
  // Predicated region
  $region14: #{conv_transpose_relu.1} parent=0 // pred_check
    _
  $region15: #{conv_transpose_relu.1} parent=0 // pred_check_branch
    %1016 = sbr.rel (0) target = $region17
  $region16: #{conv_transpose_relu.1} parent=0 // pred_region
    _
  $region17: #{conv_transpose_relu.1} parent=0 // pred_fallthru
    _

</llo_original>
